<compile_context>
chip_gen: v5e
topology: v5e:2x2
jax: 0.10.0
libtpu: 0.0.40
codegen_flags: <defaults>
</compile_context>

<pallas_src>
import functools

import jax
import jax.numpy as jnp
from jax.experimental import pallas as pl
from jax.experimental.pallas import tpu as pltpu


def _round_up(n: int, m: int) -> int:
    return ((n + m - 1) // m) * m


def qvalue_kernel(x_ref, a_ref, w1x_ref, w1a_ref, b1_ref, w2_ref, b2_ref,
                  w3_ref, b3_ref, out_ref):
    # fc1: h1 = relu(x @ W1x + a @ W1a + b1)   (split matmul -> no concat)
    h1 = jnp.dot(x_ref[...], w1x_ref[...], preferred_element_type=jnp.float32)
    h1 = h1 + jnp.dot(a_ref[...], w1a_ref[...],
                      preferred_element_type=jnp.float32)
    h1 = jnp.maximum(h1 + b1_ref[...], 0.0)

    # fc2: h2 = relu(h1 @ W2 + b2)
    h2 = jnp.dot(h1.astype(w2_ref.dtype), w2_ref[...],
                 preferred_element_type=jnp.float32)
    h2 = jnp.maximum(h2 + b2_ref[...], 0.0)

    # fc_out: q[b] = sum_h w3[0, h] * h2[b, h] + b3, emitted lane-dense as a
    # (1, TILE_B) row (contraction over the hidden axis of both operands).
    q_row = jax.lax.dot_general(
        w3_ref[...], h2.astype(w3_ref.dtype),
        dimension_numbers=(((1,), (1,)), ((), ())),
        preferred_element_type=jnp.float32)            # (1, TILE_B)
    out_ref[...] = q_row + b3_ref[0, 0]


def prepare_params(params, state_dim, action_dim, hidden_dim,
                   compute_dtype=jnp.float32):
    """One-time conversion from PyTorch layout ([out,in] weights, [out] biases)
    to kernel layout: transposed, split at the state/action boundary, and the
    hidden dim zero-padded to a multiple of 128 (pad lanes contribute zeros)."""
    w1, b1, w2, b2, w3, b3 = params
    h_pad = _round_up(hidden_dim, 128)
    ph = h_pad - hidden_dim

    w1t = jnp.asarray(w1).T                                   # [S+A, H]
    w1x = jnp.pad(w1t[:state_dim], ((0, 0), (0, ph))).astype(compute_dtype)
    w1a = jnp.pad(w1t[state_dim:], ((0, 0), (0, ph))).astype(compute_dtype)
    b1p = jnp.pad(jnp.asarray(b1).reshape(1, -1),
                  ((0, 0), (0, ph))).astype(jnp.float32)

    w2p = jnp.pad(jnp.asarray(w2).T, ((0, ph), (0, ph))).astype(compute_dtype)
    b2p = jnp.pad(jnp.asarray(b2).reshape(1, -1),
                  ((0, 0), (0, ph))).astype(jnp.float32)

    w3r = jnp.pad(jnp.asarray(w3).reshape(1, -1),
                  ((0, 0), (0, ph))).astype(compute_dtype)    # [1, h_pad]
    b3s = jnp.asarray(b3).reshape(1, 1).astype(jnp.float32)   # SMEM scalar
    return (w1x, w1a, b1p, w2p, b2p, w3r, b3s)


@functools.partial(jax.jit, static_argnames=("tile_b",))
def qvalue_forward(x, a, prepared, *, tile_b=256):
    """x: [B, state_dim], a: [B, action_dim]. Returns q: [B, 1] (float32)."""
    w1x, w1a, b1p, w2p, b2p, w3r, b3s = prepared
    B, state_dim = x.shape
    action_dim = a.shape[1]
    h_pad = w2p.shape[0]
    compute_dtype = w1x.dtype

    # Batch tile: multiple of 128 so the lane-dense output stores are full vst.
    tile_b = min(_round_up(tile_b, 128), _round_up(B, 128))
    b_pad = _round_up(B, tile_b)
    num_tiles = b_pad // tile_b

    xp = jnp.pad(x, ((0, b_pad - B), (0, 0))).astype(compute_dtype)
    ap = jnp.pad(a, ((0, b_pad - B), (0, 0))).astype(compute_dtype)

    out = pl.pallas_call(
        qvalue_kernel,
        out_shape=jax.ShapeDtypeStruct((1, b_pad), jnp.float32),
        grid=(num_tiles,),
        in_specs=[
            pl.BlockSpec((tile_b, state_dim), lambda i: (i, 0)),    # x tile
            pl.BlockSpec((tile_b, action_dim), lambda i: (i, 0)),   # a tile
            pl.BlockSpec((state_dim, h_pad), lambda i: (0, 0)),     # W1x (resident)
            pl.BlockSpec((action_dim, h_pad), lambda i: (0, 0)),    # W1a (resident)
            pl.BlockSpec((1, h_pad), lambda i: (0, 0)),             # b1
            pl.BlockSpec((h_pad, h_pad), lambda i: (0, 0)),         # W2 (resident)
            pl.BlockSpec((1, h_pad), lambda i: (0, 0)),             # b2
            pl.BlockSpec((1, h_pad), lambda i: (0, 0)),             # W3 row
            pl.BlockSpec(memory_space=pltpu.MemorySpace.SMEM),      # b3 scalar
        ],
        out_specs=pl.BlockSpec((1, tile_b), lambda i: (0, i)),      # lane-dense q
        compiler_params=pltpu.CompilerParams(
            dimension_semantics=("parallel",),
            vmem_limit_bytes=64 * 1024 * 1024,
        ),
    )(xp, ap, w1x, w1a, b1p, w2p, b2p, w3r, b3s)

    return out.reshape(-1, 1)[:B]


def init_params(key, state_dim, hidden_dim, action_dim):
    """Deterministic PyTorch-Linear-style init: U(-1/sqrt(fan_in), 1/sqrt(fan_in))."""
    def linear(key, fan_in, fan_out):
        kw, kb = jax.random.split(key)
        bound = 1.0 / jnp.sqrt(fan_in)
        w = jax.random.uniform(kw, (fan_out, fan_in), jnp.float32, -bound, bound)
        b = jax.random.uniform(kb, (fan_out,), jnp.float32, -bound, bound)
        return w, b

    k1, k2, k3 = jax.random.split(key, 3)
    w1, b1 = linear(k1, state_dim + action_dim, hidden_dim)
    w2, b2 = linear(k2, hidden_dim, hidden_dim)
    w3, b3 = linear(k3, hidden_dim, 1)
    return (w1, b1, w2, b2, w3, b3)


def reference_forward(x, a, params):
    w1, b1, w2, b2, w3, b3 = params
    cat = jnp.concatenate([x, a], axis=1)
    h1 = jax.nn.relu(cat @ w1.T + b1)
    h2 = jax.nn.relu(h1 @ w2.T + b2)
    return h2 @ w3.T + b3


if __name__ == "__main__":
    state_dim, hidden_dim, action_dim = 16, 32, 4

    key = jax.random.PRNGKey(0)
    kx, ka, kp = jax.random.split(key, 3)
    params = init_params(kp, state_dim, hidden_dim, action_dim)

    # Hoisted, one-time weight prep (transpose / split / pad).
    prepared = prepare_params(params, state_dim, action_dim, hidden_dim)

    # Small-shape check (batch=2).
    batch = 2
    x = jax.random.normal(kx, (batch, state_dim), jnp.float32)
    a = jax.random.normal(ka, (batch, action_dim), jnp.float32)
    q = qvalue_forward(x, a, prepared)
    jax.block_until_ready(q)
    q_ref = reference_forward(x, a, params)
    assert q.shape == (batch, 1), q.shape
    assert jnp.allclose(q, q_ref, atol=1e-5, rtol=1e-5), (q, q_ref)

    # Multi-tile / ragged-batch check (exercises padding and >1 grid step).
    batch2 = 300
    kx2, ka2 = jax.random.split(jax.random.PRNGKey(1))
    x2 = jax.random.normal(kx2, (batch2, state_dim), jnp.float32)
    a2 = jax.random.normal(ka2, (batch2, action_dim), jnp.float32)
    q2 = qvalue_forward(x2, a2, prepared, tile_b=128)
    jax.block_until_ready(q2)
    q2_ref = reference_forward(x2, a2, params)
    assert q2.shape == (batch2, 1), q2.shape
    assert jnp.allclose(q2, q2_ref, atol=1e-5, rtol=1e-5)

    print("KERNEL_OK")
</pallas_src>

<mosaic_0001>
module attributes {stable_mosaic.version = 11 : i64} {
  func.func @qvalue_kernel(%arg0: i32, %arg1: memref<128x16xf32, #tpu.memory_space<vmem>>, %arg2: memref<128x4xf32, #tpu.memory_space<vmem>>, %arg3: memref<16x128xf32, #tpu.memory_space<vmem>>, %arg4: memref<4x128xf32, #tpu.memory_space<vmem>>, %arg5: memref<1x128xf32, #tpu.memory_space<vmem>>, %arg6: memref<128x128xf32, #tpu.memory_space<vmem>>, %arg7: memref<1x128xf32, #tpu.memory_space<vmem>>, %arg8: memref<1x128xf32, #tpu.memory_space<vmem>>, %arg9: memref<1x1xf32, #tpu.memory_space<smem>>, %arg10: memref<1x128xf32, #tpu.memory_space<vmem>>) attributes {dimension_semantics = [#tpu.dimension_semantics<parallel>], iteration_bounds = array<i64: 1>, scalar_prefetch = 0 : i64, scratch_operands = 0 : i64, tpu.core_type = #tpu.core_type<tc>, window_params = [{transform_indices = @transform_0, window_bounds = array<i64: 128, 16>}, {transform_indices = @transform_1, window_bounds = array<i64: 128, 4>}, {pipeline_mode = #tpu.pipeline_mode<synchronous>, transform_indices = @transform_2, window_bounds = array<i64: 16, 128>}, {pipeline_mode = #tpu.pipeline_mode<synchronous>, transform_indices = @transform_3, window_bounds = array<i64: 4, 128>}, {pipeline_mode = #tpu.pipeline_mode<synchronous>, transform_indices = @transform_4, window_bounds = array<i64: 1, 128>}, {pipeline_mode = #tpu.pipeline_mode<synchronous>, transform_indices = @transform_5, window_bounds = array<i64: 128, 128>}, {pipeline_mode = #tpu.pipeline_mode<synchronous>, transform_indices = @transform_6, window_bounds = array<i64: 1, 128>}, {pipeline_mode = #tpu.pipeline_mode<synchronous>, transform_indices = @transform_7, window_bounds = array<i64: 1, 128>}, {transform_indices = @transform_8, window_bounds = array<i64: 1, 1>}, {transform_indices = @transform_9, window_bounds = array<i64: 1, 128>}]} {
    %c0 = arith.constant 0 : index
    %c0_0 = arith.constant 0 : index
    %0 = vector.load %arg1[%c0, %c0_0] : memref<128x16xf32, #tpu.memory_space<vmem>>, vector<128x16xf32>
    %c0_1 = arith.constant 0 : index
    %c0_2 = arith.constant 0 : index
    %1 = vector.load %arg3[%c0_1, %c0_2] : memref<16x128xf32, #tpu.memory_space<vmem>>, vector<16x128xf32>
    %cst = arith.constant dense<0.000000e+00> : vector<128x128xf32>
    %2 = tpu.matmul %0, %1, %cst {dimension_numbers = #tpu.dot_dimension_numbers<[1], [0], [0], [1], [0, 0, 1, 1], [], []>} : vector<128x16xf32>, vector<16x128xf32>, vector<128x128xf32> -> vector<128x128xf32>
    %c0_3 = arith.constant 0 : index
    %c0_4 = arith.constant 0 : index
    %3 = vector.load %arg2[%c0_3, %c0_4] : memref<128x4xf32, #tpu.memory_space<vmem>>, vector<128x4xf32>
    %c0_5 = arith.constant 0 : index
    %c0_6 = arith.constant 0 : index
    %4 = vector.load %arg4[%c0_5, %c0_6] : memref<4x128xf32, #tpu.memory_space<vmem>>, vector<4x128xf32>
    %cst_7 = arith.constant dense<0.000000e+00> : vector<128x128xf32>
    %5 = tpu.matmul %3, %4, %cst_7 {dimension_numbers = #tpu.dot_dimension_numbers<[1], [0], [0], [1], [0, 0, 1, 1], [], []>} : vector<128x4xf32>, vector<4x128xf32>, vector<128x128xf32> -> vector<128x128xf32>
    %6 = arith.addf %2, %5 : vector<128x128xf32>
    %c0_8 = arith.constant 0 : index
    %c0_9 = arith.constant 0 : index
    %7 = vector.load %arg5[%c0_8, %c0_9] : memref<1x128xf32, #tpu.memory_space<vmem>>, vector<1x128xf32>
    %8 = vector.broadcast %7 : vector<1x128xf32> to vector<128x128xf32>
    %9 = arith.addf %6, %8 : vector<128x128xf32>
    %cst_10 = arith.constant 0.000000e+00 : f32
    %10 = vector.broadcast %cst_10 : f32 to vector<128x128xf32>
    %11 = arith.maximumf %9, %10 : vector<128x128xf32>
    %c0_11 = arith.constant 0 : index
    %c0_12 = arith.constant 0 : index
    %12 = vector.load %arg6[%c0_11, %c0_12] : memref<128x128xf32, #tpu.memory_space<vmem>>, vector<128x128xf32>
    %cst_13 = arith.constant dense<0.000000e+00> : vector<128x128xf32>
    %13 = tpu.matmul %11, %12, %cst_13 {dimension_numbers = #tpu.dot_dimension_numbers<[1], [0], [0], [1], [0, 0, 1, 1], [], []>} : vector<128x128xf32>, vector<128x128xf32>, vector<128x128xf32> -> vector<128x128xf32>
    %c0_14 = arith.constant 0 : index
    %c0_15 = arith.constant 0 : index
    %14 = vector.load %arg7[%c0_14, %c0_15] : memref<1x128xf32, #tpu.memory_space<vmem>>, vector<1x128xf32>
    %15 = vector.broadcast %14 : vector<1x128xf32> to vector<128x128xf32>
    %16 = arith.addf %13, %15 : vector<128x128xf32>
    %cst_16 = arith.constant 0.000000e+00 : f32
    %17 = vector.broadcast %cst_16 : f32 to vector<128x128xf32>
    %18 = arith.maximumf %16, %17 : vector<128x128xf32>
    %c0_17 = arith.constant 0 : index
    %c0_18 = arith.constant 0 : index
    %19 = vector.load %arg8[%c0_17, %c0_18] : memref<1x128xf32, #tpu.memory_space<vmem>>, vector<1x128xf32>
    %cst_19 = arith.constant dense<0.000000e+00> : vector<1x128xf32>
    %20 = tpu.matmul %19, %18, %cst_19 {dimension_numbers = #tpu.dot_dimension_numbers<[1], [1], [0], [0], [0, 0, 1, 0], [], []>} : vector<1x128xf32>, vector<128x128xf32>, vector<1x128xf32> -> vector<1x128xf32>
    %c0_20 = arith.constant 0 : index
    %c0_21 = arith.constant 0 : index
    %21 = memref.load %arg9[%c0_20, %c0_21] : memref<1x1xf32, #tpu.memory_space<smem>>
    %22 = vector.broadcast %21 : f32 to vector<1x128xf32>
    %23 = arith.addf %20, %22 : vector<1x128xf32>
    %c0_22 = arith.constant 0 : index
    %c0_23 = arith.constant 0 : index
    %24 = vector.load %arg10[%c0_22, %c0_23] : memref<1x128xf32, #tpu.memory_space<vmem>>, vector<1x128xf32>
    tpu.vector_store %arg10[%c0_22, %c0_23], %23 {strides = array<i32>} : memref<1x128xf32, #tpu.memory_space<vmem>>, vector<1x128xf32>,
    return
  }
  func.func @transform_0(%arg0: i32) -> (i32, i32) {
    %c0_i32 = arith.constant 0 : i32
    %c0_i32_0 = arith.constant 0 : i32
    return %arg0, %c0_i32 : i32, i32
  }
  func.func @transform_1(%arg0: i32) -> (i32, i32) {
    %c0_i32 = arith.constant 0 : i32
    %c0_i32_0 = arith.constant 0 : i32
    return %arg0, %c0_i32 : i32, i32
  }
  func.func @transform_2(%arg0: i32) -> (i32, i32) {
    %c0_i32 = arith.constant 0 : i32
    %c0_i32_0 = arith.constant 0 : i32
    %c0_i32_1 = arith.constant 0 : i32
    return %c0_i32, %c0_i32_0 : i32, i32
  }
  func.func @transform_3(%arg0: i32) -> (i32, i32) {
    %c0_i32 = arith.constant 0 : i32
    %c0_i32_0 = arith.constant 0 : i32
    %c0_i32_1 = arith.constant 0 : i32
    return %c0_i32, %c0_i32_0 : i32, i32
  }
  func.func @transform_4(%arg0: i32) -> (i32, i32) {
    %c0_i32 = arith.constant 0 : i32
    %c0_i32_0 = arith.constant 0 : i32
    %c0_i32_1 = arith.constant 0 : i32
    return %c0_i32, %c0_i32_0 : i32, i32
  }
  func.func @transform_5(%arg0: i32) -> (i32, i32) {
    %c0_i32 = arith.constant 0 : i32
    %c0_i32_0 = arith.constant 0 : i32
    %c0_i32_1 = arith.constant 0 : i32
    return %c0_i32, %c0_i32_0 : i32, i32
  }
  func.func @transform_6(%arg0: i32) -> (i32, i32) {
    %c0_i32 = arith.constant 0 : i32
    %c0_i32_0 = arith.constant 0 : i32
    %c0_i32_1 = arith.constant 0 : i32
    return %c0_i32, %c0_i32_0 : i32, i32
  }
  func.func @transform_7(%arg0: i32) -> (i32, i32) {
    %c0_i32 = arith.constant 0 : i32
    %c0_i32_0 = arith.constant 0 : i32
    %c0_i32_1 = arith.constant 0 : i32
    return %c0_i32, %c0_i32_0 : i32, i32
  }
  func.func @transform_8(%arg0: i32) -> (i32, i32) {
    %c0_i32 = arith.constant 0 : i32
    %c0_i32_0 = arith.constant 0 : i32
    %c0_i32_1 = arith.constant 0 : i32
    return %c0_i32, %c0_i32_0 : i32, i32
  }
  func.func @transform_9(%arg0: i32) -> (i32, i32) {
    %c0_i32 = arith.constant 0 : i32
    %c0_i32_0 = arith.constant 0 : i32
    return %c0_i32, %arg0 : i32, i32
  }
}

</mosaic_0001>

<llo_original>
// kernel: qvalue_forward.1
$region0: #{qvalue_forward.1}
  #allocation0 [shape = 'u32[]', space=smem, size = 0x4, offset = 0x4, fixed_abs, tag = 'smem constant byte address 0x4 - core index']
  #allocation1 [shape = 'u32[72,128]{1,0:T(1,128)}', space=vmem, size = 0x9000, scoped, tag = 'internal scratch']
  #allocation2 [shape = 'f32[1,1]{1,0:T(1,128)S(6)}', space=smem, size = 0x200, scoped, tag = 'scoped memory for qvalue_forward.1']
  %s0 = inlined_call_operand.vmem [shape: f32[128,16], index: 0, kind: input, shape index: {}]
  %s1 = inlined_call_operand.vmem [shape: f32[128,4], index: 1, kind: input, shape index: {}]
  %s2 = inlined_call_operand.vmem [shape: f32[16,128], index: 2, kind: input, shape index: {}]
  %s3 = inlined_call_operand.vmem [shape: f32[4,128], index: 3, kind: input, shape index: {}]
  %s4 = inlined_call_operand.vmem [shape: f32[1,128], index: 4, kind: input, shape index: {}]
  %s5 = inlined_call_operand.vmem [shape: f32[128,128], index: 5, kind: input, shape index: {}]
  %s6 = inlined_call_operand.vmem [shape: f32[1,128], index: 6, kind: input, shape index: {}]
  %s7 = inlined_call_operand.vmem [shape: f32[1,128], index: 7, kind: input, shape index: {}]
  %s8 = inlined_call_operand.<no memory space> [shape: f32[1,1], index: 8, kind: input, shape index: {}]
  %s9 = inlined_call_operand.vmem [shape: f32[1,128], index: 9, kind: output, shape index: {}]
  %s10 = sld [smem:[#allocation0]]
  $region46: #{qvalue_forward.1} parent=0
    _
  %s12 = ssub.s32 1, %s10
  %s13 = scalar_select 0, %s12, %s10
  %14 = sst [smem:[#allocation2]] %s8
  // Predicated region
  $region2: #{qvalue_forward.1} parent=0 // pred_check
    _
  $region3: #{qvalue_forward.1} parent=0 // pred_check_branch
    %16 = sbr.rel (0) target = $region5
  $region4: #{qvalue_forward.1} parent=0 // pred_region
    _
  $region5: #{qvalue_forward.1} parent=0 // pred_fallthru
    _
  // Predicated region
  $region6: #{qvalue_forward.1} parent=0 // pred_check
    _
  $region7: #{qvalue_forward.1} parent=0 // pred_check_branch
    %18 = sbr.rel (0) target = $region9
  $region8: #{qvalue_forward.1} parent=0 // pred_region
    _
  $region9: #{qvalue_forward.1} parent=0 // pred_fallthru
    _
  // Predicated region
  $region10: #{qvalue_forward.1} parent=0 // pred_check
    _
  $region11: #{qvalue_forward.1} parent=0 // pred_check_branch
    %20 = sbr.rel (0) target = $region13
  $region12: #{qvalue_forward.1} parent=0 // pred_region
    _
  $region13: #{qvalue_forward.1} parent=0 // pred_fallthru
    _
  // Predicated region
  $region14: #{qvalue_forward.1} parent=0 // pred_check
    _
  $region15: #{qvalue_forward.1} parent=0 // pred_check_branch
    %22 = sbr.rel (0) target = $region17
  $region16: #{qvalue_forward.1} parent=0 // pred_region
    _
  $region17: #{qvalue_forward.1} parent=0 // pred_fallthru
    _
  // Predicated region
  $region18: #{qvalue_forward.1} parent=0 // pred_check
    _
  $region19: #{qvalue_forward.1} parent=0 // pred_check_branch
    %24 = sbr.rel (0) target = $region21
  $region20: #{qvalue_forward.1} parent=0 // pred_region
    _
  $region21: #{qvalue_forward.1} parent=0 // pred_fallthru
    _
  // Predicated region
  $region22: #{qvalue_forward.1} parent=0 // pred_check
    _
  $region23: #{qvalue_forward.1} parent=0 // pred_check_branch
    %26 = sbr.rel (0) target = $region25
  $region24: #{qvalue_forward.1} parent=0 // pred_region
    _
  $region25: #{qvalue_forward.1} parent=0 // pred_fallthru
    _
  // Predicated region
  $region26: #{qvalue_forward.1} parent=0 // pred_check
    _
  $region27: #{qvalue_forward.1} parent=0 // pred_check_branch
    %28 = sbr.rel (0) target = $region29
  $region28: #{qvalue_forward.1} parent=0 // pred_region
    _
  $region29: #{qvalue_forward.1} parent=0 // pred_fallthru
    _
  // Predicated region
  $region30: #{qvalue_forward.1} parent=0 // pred_check
    _
  $region31: #{qvalue_forward.1} parent=0 // pred_check_branch
    %30 = sbr.rel (0) target = $region33
  $region32: #{qvalue_forward.1} parent=0 // pred_region
    _
  $region33: #{qvalue_forward.1} parent=0 // pred_fallthru
    _
  // Predicated region
  $region34: #{qvalue_forward.1} parent=0 // pred_check
    _
  $region35: #{qvalue_forward.1} parent=0 // pred_check_branch
    %32 = sbr.rel (0) target = $region37
  $region36: #{qvalue_forward.1} parent=0 // pred_region
    _
  $region37: #{qvalue_forward.1} parent=0 // pred_fallthru
    _
  %v33 = vld [vmem:[%s0] sm:$0xff]
  %v34 = vld [vmem:[%s0 + $0x8] sm:$0xff]
  %v35 = vld [vmem:[%s0 + $0x10] sm:$0xff]
  %v36 = vld [vmem:[%s0 + $0x18] sm:$0xff]
  %v37 = vld [vmem:[%s0 + $0x20] sm:$0xff]
  %v38 = vld [vmem:[%s0 + $0x28] sm:$0xff]
  %v39 = vld [vmem:[%s0 + $0x30] sm:$0xff]
  %v40 = vld [vmem:[%s0 + $0x38] sm:$0xff]
  %v41 = vld [vmem:[%s0 + $0x40] sm:$0xff]
  %v42 = vld [vmem:[%s0 + $0x48] sm:$0xff]
  %v43 = vld [vmem:[%s0 + $0x50] sm:$0xff]
  %v44 = vld [vmem:[%s0 + $0x58] sm:$0xff]
  %v45 = vld [vmem:[%s0 + $0x60] sm:$0xff]
  %v46 = vld [vmem:[%s0 + $0x68] sm:$0xff]
  %v47 = vld [vmem:[%s0 + $0x70] sm:$0xff]
  %v48 = vld [vmem:[%s0 + $0x78] sm:$0xff]
  %v49 = vld [vmem:[%s2] sm:$0xff]
  %v50 = vld [vmem:[%s2 + $0x8] sm:$0xff]
  %v51 = vld [vmem:[%s1] sm:$0xff]
  %v52 = vld [vmem:[%s1 + $0x8] sm:$0xff]
  %v53 = vld [vmem:[%s1 + $0x10] sm:$0xff]
  %v54 = vld [vmem:[%s1 + $0x18] sm:$0xff]
  %v55 = vld [vmem:[%s1 + $0x20] sm:$0xff]
  %v56 = vld [vmem:[%s1 + $0x28] sm:$0xff]
  %v57 = vld [vmem:[%s1 + $0x30] sm:$0xff]
  %v58 = vld [vmem:[%s1 + $0x38] sm:$0xff]
  %v59 = vld [vmem:[%s1 + $0x40] sm:$0xff]
  %v60 = vld [vmem:[%s1 + $0x48] sm:$0xff]
  %v61 = vld [vmem:[%s1 + $0x50] sm:$0xff]
  %v62 = vld [vmem:[%s1 + $0x58] sm:$0xff]
  %v63 = vld [vmem:[%s1 + $0x60] sm:$0xff]
  %v64 = vld [vmem:[%s1 + $0x68] sm:$0xff]
  %v65 = vld [vmem:[%s1 + $0x70] sm:$0xff]
  %v66 = vld [vmem:[%s1 + $0x78] sm:$0xff]
  %v67 = vld [vmem:[%s3] sm:$0xf]
  %vm68 = vcmask 31744
  %v70 = vsel %vm68, %v51, 0
  %v73 = vsel %vm68, %v52, 0
  %v76 = vsel %vm68, %v53, 0
  %v79 = vsel %vm68, %v54, 0
  %v82 = vsel %vm68, %v55, 0
  %v85 = vsel %vm68, %v56, 0
  %v88 = vsel %vm68, %v57, 0
  %v91 = vsel %vm68, %v58, 0
  %v94 = vsel %vm68, %v59, 0
  %v97 = vsel %vm68, %v60, 0
  %v100 = vsel %vm68, %v61, 0
  %v103 = vsel %vm68, %v62, 0
  %v106 = vsel %vm68, %v63, 0
  %v109 = vsel %vm68, %v64, 0
  %v112 = vsel %vm68, %v65, 0
  %v115 = vsel %vm68, %v66, 0
  %vm117 = vcmask 1043456
  %v119 = vsel %vm117, %v67, 0
  %121 = vmatpush.msra.mxu0 0.0
  %122 = vmatpush.msra.mxu0 0.0
  %123 = vmatpush.msra.mxu0 0.0
  %124 = vmatpush.msra.mxu0 0.0
  %125 = vmatpush.msra.mxu0 0.0
  %126 = vmatpush.msra.mxu0 0.0
  %127 = vmatpush.msra.mxu0 0.0
  %128 = vmatpush.msra.mxu0 0.0
  %129 = vmatpush.msra.mxu0 0.0
  %130 = vmatpush.msra.mxu0 0.0
  %131 = vmatpush.msra.mxu0 0.0
  %132 = vmatpush.msra.mxu0 0.0
  %133 = vmatpush.msra.mxu0 0.0
  %134 = vmatpush.msra.mxu0 0.0
  %135 = vmatpush.msra.mxu0 0.0
  %136 = vmatpush.msra.mxu0 %v119
  %137 = vmatmul.f32.gmra.mxu0 %v70
  %v138 = vpop.f32.mrf.mxu0
  %v139 = vadd.f32 0.0, %v138
  %140 = vmatmul.f32.gmra.mxu0 %v73
  %v141 = vpop.f32.mrf.mxu0
  %v142 = vadd.f32 0.0, %v141
  %143 = vmatmul.f32.gmra.mxu0 %v76
  %v144 = vpop.f32.mrf.mxu0
  %v145 = vadd.f32 0.0, %v144
  %146 = vmatmul.f32.gmra.mxu0 %v79
  %v147 = vpop.f32.mrf.mxu0
  %v148 = vadd.f32 0.0, %v147
  %149 = vmatmul.f32.gmra.mxu0 %v82
  %v150 = vpop.f32.mrf.mxu0
  %v151 = vadd.f32 0.0, %v150
  %152 = vmatmul.f32.gmra.mxu0 %v85
  %v153 = vpop.f32.mrf.mxu0
  %v154 = vadd.f32 0.0, %v153
  %155 = vmatmul.f32.gmra.mxu0 %v88
  %v156 = vpop.f32.mrf.mxu0
  %v157 = vadd.f32 0.0, %v156
  %158 = vmatmul.f32.gmra.mxu0 %v91
  %v159 = vpop.f32.mrf.mxu0
  %v160 = vadd.f32 0.0, %v159
  %161 = vmatmul.f32.gmra.mxu0 %v94
  %v162 = vpop.f32.mrf.mxu0
  %v163 = vadd.f32 0.0, %v162
  %164 = vmatmul.f32.gmra.mxu0 %v97
  %v165 = vpop.f32.mrf.mxu0
  %v166 = vadd.f32 0.0, %v165
  %167 = vmatmul.f32.gmra.mxu0 %v100
  %v168 = vpop.f32.mrf.mxu0
  %v169 = vadd.f32 0.0, %v168
  %170 = vmatmul.f32.gmra.mxu0 %v103
  %v171 = vpop.f32.mrf.mxu0
  %v172 = vadd.f32 0.0, %v171
  %173 = vmatmul.f32.gmra.mxu0 %v106
  %v174 = vpop.f32.mrf.mxu0
  %v175 = vadd.f32 0.0, %v174
  %176 = vmatmul.f32.gmra.mxu0 %v109
  %v177 = vpop.f32.mrf.mxu0
  %v178 = vadd.f32 0.0, %v177
  %179 = vmatmul.f32.gmra.mxu0 %v112
  %v180 = vpop.f32.mrf.mxu0
  %v181 = vadd.f32 0.0, %v180
  %182 = vmatmul.f32.gmra.mxu0 %v115
  %v183 = vpop.f32.mrf.mxu0
  %v184 = vadd.f32 0.0, %v183
  %185 = vdwg.mxu0
  %vm186 = vcmask 130048
  %v188 = vsel %vm186, %v33, 0
  %v191 = vsel %vm186, %v34, 0
  %v194 = vsel %vm186, %v35, 0
  %v197 = vsel %vm186, %v36, 0
  %v200 = vsel %vm186, %v37, 0
  %v203 = vsel %vm186, %v38, 0
  %v206 = vsel %vm186, %v39, 0
  %v209 = vsel %vm186, %v40, 0
  %v212 = vsel %vm186, %v41, 0
  %v215 = vsel %vm186, %v42, 0
  %v218 = vsel %vm186, %v43, 0
  %v221 = vsel %vm186, %v44, 0
  %v224 = vsel %vm186, %v45, 0
  %v227 = vsel %vm186, %v46, 0
  %v230 = vsel %vm186, %v47, 0
  %v233 = vsel %vm186, %v48, 0
  %235 = vmatpush.msra.mxu0 0.0
  %236 = vmatpush.msra.mxu0 0.0
  %237 = vmatpush.msra.mxu0 0.0
  %238 = vmatpush.msra.mxu0 0.0
  %239 = vmatpush.msra.mxu0 0.0
  %240 = vmatpush.msra.mxu0 0.0
  %241 = vmatpush.msra.mxu0 0.0
  %242 = vmatpush.msra.mxu0 0.0
  %243 = vmatpush.msra.mxu0 0.0
  %244 = vmatpush.msra.mxu0 0.0
  %245 = vmatpush.msra.mxu0 0.0
  %246 = vmatpush.msra.mxu0 0.0
  %247 = vmatpush.msra.mxu0 0.0
  %248 = vmatpush.msra.mxu0 0.0
  %249 = vmatpush.msra.mxu0 %v50
  %250 = vmatpush.msra.mxu0 %v49
  %251 = vmatmul.f32.gmra.mxu0 %v188
  %v252 = vpop.f32.mrf.mxu0
  %v253 = vadd.f32 %v139, %v252
  %254 = vmatmul.f32.gmra.mxu0 %v191
  %v255 = vpop.f32.mrf.mxu0
  %v256 = vadd.f32 %v142, %v255
  %257 = vmatmul.f32.gmra.mxu0 %v194
  %v258 = vpop.f32.mrf.mxu0
  %v259 = vadd.f32 %v145, %v258
  %260 = vmatmul.f32.gmra.mxu0 %v197
  %v261 = vpop.f32.mrf.mxu0
  %v262 = vadd.f32 %v148, %v261
  %263 = vmatmul.f32.gmra.mxu0 %v200
  %v264 = vpop.f32.mrf.mxu0
  %v265 = vadd.f32 %v151, %v264
  %266 = vmatmul.f32.gmra.mxu0 %v203
  %v267 = vpop.f32.mrf.mxu0
  %v268 = vadd.f32 %v154, %v267
  %269 = vmatmul.f32.gmra.mxu0 %v206
  %v270 = vpop.f32.mrf.mxu0
  %v271 = vadd.f32 %v157, %v270
  %272 = vmatmul.f32.gmra.mxu0 %v209
  %v273 = vpop.f32.mrf.mxu0
  %v274 = vadd.f32 %v160, %v273
  %275 = vmatmul.f32.gmra.mxu0 %v212
  %v276 = vpop.f32.mrf.mxu0
  %v277 = vadd.f32 %v163, %v276
  %278 = vmatmul.f32.gmra.mxu0 %v215
  %v279 = vpop.f32.mrf.mxu0
  %v280 = vadd.f32 %v166, %v279
  %281 = vmatmul.f32.gmra.mxu0 %v218
  %v282 = vpop.f32.mrf.mxu0
  %v283 = vadd.f32 %v169, %v282
  %284 = vmatmul.f32.gmra.mxu0 %v221
  %v285 = vpop.f32.mrf.mxu0
  %v286 = vadd.f32 %v172, %v285
  %287 = vmatmul.f32.gmra.mxu0 %v224
  %v288 = vpop.f32.mrf.mxu0
  %v289 = vadd.f32 %v175, %v288
  %290 = vmatmul.f32.gmra.mxu0 %v227
  %v291 = vpop.f32.mrf.mxu0
  %v292 = vadd.f32 %v178, %v291
  %293 = vmatmul.f32.gmra.mxu0 %v230
  %v294 = vpop.f32.mrf.mxu0
  %v295 = vadd.f32 %v181, %v294
  %296 = vmatmul.f32.gmra.mxu0 %v233
  %v297 = vpop.f32.mrf.mxu0
  %v298 = vadd.f32 %v184, %v297
  %299 = vdwg.mxu0
  %v300 = vld [vmem:[%s4] sm:$0x1]
  %v302 = vperm.slane %v300, 0
  %v304 = vadd.f32 %v253, %v302
  %v305 = vadd.f32 %v256, %v302
  %v306 = vadd.f32 %v259, %v302
  %v307 = vadd.f32 %v262, %v302
  %v308 = vadd.f32 %v265, %v302
  %v309 = vadd.f32 %v268, %v302
  %v310 = vadd.f32 %v271, %v302
  %v311 = vadd.f32 %v274, %v302
  %v312 = vadd.f32 %v277, %v302
  %v313 = vadd.f32 %v280, %v302
  %v314 = vadd.f32 %v283, %v302
  %v315 = vadd.f32 %v286, %v302
  %v316 = vadd.f32 %v289, %v302
  %v317 = vadd.f32 %v292, %v302
  %v318 = vadd.f32 %v295, %v302
  %v319 = vadd.f32 %v298, %v302
  %v320 = vmax.f32 %v304, 0.0
  %v321 = vmax.f32 %v305, 0.0
  %v322 = vmax.f32 %v306, 0.0
  %v323 = vmax.f32 %v307, 0.0
  %v324 = vmax.f32 %v308, 0.0
  %v325 = vmax.f32 %v309, 0.0
  %v326 = vmax.f32 %v310, 0.0
  %v327 = vmax.f32 %v311, 0.0
  %v328 = vmax.f32 %v312, 0.0
  %v329 = vmax.f32 %v313, 0.0
  %v330 = vmax.f32 %v314, 0.0
  %v331 = vmax.f32 %v315, 0.0
  %v332 = vmax.f32 %v316, 0.0
  %v333 = vmax.f32 %v317, 0.0
  %v334 = vmax.f32 %v318, 0.0
  %v335 = vmax.f32 %v319, 0.0
  %v336 = vld [vmem:[%s5] sm:$0xff]
  %v337 = vld [vmem:[%s5 + $0x8] sm:$0xff]
  %v338 = vld [vmem:[%s5 + $0x10] sm:$0xff]
  %v339 = vld [vmem:[%s5 + $0x18] sm:$0xff]
  %v340 = vld [vmem:[%s5 + $0x20] sm:$0xff]
  %v341 = vld [vmem:[%s5 + $0x28] sm:$0xff]
  %v342 = vld [vmem:[%s5 + $0x30] sm:$0xff]
  %v343 = vld [vmem:[%s5 + $0x38] sm:$0xff]
  %v344 = vld [vmem:[%s5 + $0x40] sm:$0xff]
  %v345 = vld [vmem:[%s5 + $0x48] sm:$0xff]
  %v346 = vld [vmem:[%s5 + $0x50] sm:$0xff]
  %v347 = vld [vmem:[%s5 + $0x58] sm:$0xff]
  %v348 = vld [vmem:[%s5 + $0x60] sm:$0xff]
  %v349 = vld [vmem:[%s5 + $0x68] sm:$0xff]
  %v350 = vld [vmem:[%s5 + $0x70] sm:$0xff]
  %v351 = vld [vmem:[%s5 + $0x78] sm:$0xff]
  %v352 = vld [vmem:[%s6] sm:$0x1]
  %v354 = vperm.slane %v352, 0
  %356 = vmatpush.msra.mxu0 %v351
  %357 = vmatpush.msra.mxu0 %v350
  %358 = vmatpush.msra.mxu0 %v349
  %359 = vmatpush.msra.mxu0 %v348
  %360 = vmatpush.msra.mxu0 %v347
  %361 = vmatpush.msra.mxu0 %v346
  %362 = vmatpush.msra.mxu0 %v345
  %363 = vmatpush.msra.mxu0 %v344
  %364 = vmatpush.msra.mxu0 %v343
  %365 = vmatpush.msra.mxu0 %v342
  %366 = vmatpush.msra.mxu0 %v341
  %367 = vmatpush.msra.mxu0 %v340
  %368 = vmatpush.msra.mxu0 %v339
  %369 = vmatpush.msra.mxu0 %v338
  %370 = vmatpush.msra.mxu0 %v337
  %371 = vmatpush.msra.mxu0 %v336
  %372 = vmatmul.f32.gmra.mxu0 %v320
  %v373 = vpop.f32.mrf.mxu0
  %v374 = vadd.f32 %v354, %v373
  %375 = vmatmul.f32.gmra.mxu0 %v321
  %v376 = vpop.f32.mrf.mxu0
  %v377 = vadd.f32 %v354, %v376
  %378 = vmatmul.f32.gmra.mxu0 %v322
  %v379 = vpop.f32.mrf.mxu0
  %v380 = vadd.f32 %v354, %v379
  %381 = vmatmul.f32.gmra.mxu0 %v323
  %v382 = vpop.f32.mrf.mxu0
  %v383 = vadd.f32 %v354, %v382
  %384 = vmatmul.f32.gmra.mxu0 %v324
  %v385 = vpop.f32.mrf.mxu0
  %v386 = vadd.f32 %v354, %v385
  %387 = vmatmul.f32.gmra.mxu0 %v325
  %v388 = vpop.f32.mrf.mxu0
  %v389 = vadd.f32 %v354, %v388
  %390 = vmatmul.f32.gmra.mxu0 %v326
  %v391 = vpop.f32.mrf.mxu0
  %v392 = vadd.f32 %v354, %v391
  %393 = vmatmul.f32.gmra.mxu0 %v327
  %v394 = vpop.f32.mrf.mxu0
  %v395 = vadd.f32 %v354, %v394
  %396 = vmatmul.f32.gmra.mxu0 %v328
  %v397 = vpop.f32.mrf.mxu0
  %v398 = vadd.f32 %v354, %v397
  %399 = vmatmul.f32.gmra.mxu0 %v329
  %v400 = vpop.f32.mrf.mxu0
  %v401 = vadd.f32 %v354, %v400
  %402 = vmatmul.f32.gmra.mxu0 %v330
  %v403 = vpop.f32.mrf.mxu0
  %v404 = vadd.f32 %v354, %v403
  %405 = vmatmul.f32.gmra.mxu0 %v331
  %v406 = vpop.f32.mrf.mxu0
  %v407 = vadd.f32 %v354, %v406
  %408 = vmatmul.f32.gmra.mxu0 %v332
  %v409 = vpop.f32.mrf.mxu0
  %v410 = vadd.f32 %v354, %v409
  %411 = vmatmul.f32.gmra.mxu0 %v333
  %v412 = vpop.f32.mrf.mxu0
  %v413 = vadd.f32 %v354, %v412
  %414 = vmatmul.f32.gmra.mxu0 %v334
  %v415 = vpop.f32.mrf.mxu0
  %v416 = vadd.f32 %v354, %v415
  %417 = vmatmul.f32.gmra.mxu0 %v335
  %v418 = vpop.f32.mrf.mxu0
  %v419 = vadd.f32 %v354, %v418
  %420 = vdwg.mxu0
  %v421 = vmax.f32 %v374, 0.0
  %v422 = vmax.f32 %v377, 0.0
  %v423 = vmax.f32 %v380, 0.0
  %v424 = vmax.f32 %v383, 0.0
  %v425 = vmax.f32 %v386, 0.0
  %v426 = vmax.f32 %v389, 0.0
  %v427 = vmax.f32 %v392, 0.0
  %v428 = vmax.f32 %v395, 0.0
  %v429 = vmax.f32 %v398, 0.0
  %v430 = vmax.f32 %v401, 0.0
  %v431 = vmax.f32 %v404, 0.0
  %v432 = vmax.f32 %v407, 0.0
  %v433 = vmax.f32 %v410, 0.0
  %v434 = vmax.f32 %v413, 0.0
  %v435 = vmax.f32 %v416, 0.0
  %v436 = vmax.f32 %v419, 0.0
  %v437 = vld [vmem:[%s7] sm:$0x1]
  %s438 = sld [smem:[#allocation2]]
  %v439 = vstv %s438
  %440 = vmatpush.xpose.msra.mxu0 %v436
  %441 = vmatpush.xpose.msra.mxu0 %v435
  %442 = vmatpush.xpose.msra.mxu0 %v434
  %443 = vmatpush.xpose.msra.mxu0 %v433
  %444 = vmatpush.xpose.msra.mxu0 %v432
  %445 = vmatpush.xpose.msra.mxu0 %v431
  %446 = vmatpush.xpose.msra.mxu0 %v430
  %447 = vmatpush.xpose.msra.mxu0 %v429
  %448 = vmatpush.xpose.msra.mxu0 %v428
  %449 = vmatpush.xpose.msra.mxu0 %v427
  %450 = vmatpush.xpose.msra.mxu0 %v426
  %451 = vmatpush.xpose.msra.mxu0 %v425
  %452 = vmatpush.xpose.msra.mxu0 %v424
  %453 = vmatpush.xpose.msra.mxu0 %v423
  %454 = vmatpush.xpose.msra.mxu0 %v422
  %455 = vmatpush.xpose.msra.mxu0 %v421
  %456 = vmatmul.f32.gmra.mxu0 %v437
  %v457 = vpop.f32.mrf.mxu0
  %v458 = vadd.f32 %v439, %v457
  %459 = vdwg.mxu0
  %460 = vst [vmem:[%s9] sm:$0x1] %v458
  // Predicated region
  $region38: #{qvalue_forward.1} parent=0 // pred_check
    _
  $region39: #{qvalue_forward.1} parent=0 // pred_check_branch
    %462 = sbr.rel (0) target = $region41
  $region40: #{qvalue_forward.1} parent=0 // pred_region
    _
  $region41: #{qvalue_forward.1} parent=0 // pred_fallthru
    _
  // Predicated region
  $region42: #{qvalue_forward.1} parent=0 // pred_check
    _
  $region43: #{qvalue_forward.1} parent=0 // pred_check_branch
    %464 = sbr.rel (0) target = $region45
  $region44: #{qvalue_forward.1} parent=0 // pred_region
    _
  $region45: #{qvalue_forward.1} parent=0 // pred_fallthru
    _

</llo_original>
